<compile_context>
chip_gen: v5e
topology: v5e:2x2
jax: 0.10.0
libtpu: 0.0.40
codegen_flags: <defaults>
</compile_context>

<pallas_src>
import jax
import jax.numpy as jnp
from jax.experimental import pallas as pl
from jax.experimental.pallas import tpu as pltpu

# ---- sizes (small, consistent with the module) ---------------------------
B = 2            # batch
N_PTS = 64       # object points per cloud
D_PAD = 8        # xyz padded 3 -> 8 (zero weight rows => exact no-op padding)
J = 21           # hand joints
HAND_PAD = 64    # 21*3 = 63 padded -> 64
H_OBJ = 64       # obj_encoder hidden width
C_OBJ = 64       # object latent dim
H_ENC = 128      # encoder_latent hidden width
Z_DIM = 128      # latent z dim, matches p0_z = Normal(zeros(128), ones(128))
H_DEC = 128      # decoder hidden width
OUT_PAD = 64     # decoder output 63 -> 64 padded
OUT_SLAB = 2 * Z_DIM + OUT_PAD + C_OBJ   # 384 = mu | logstd | pred | c (lane-dense)

# ---- packed weight-slab row offsets (all multiples of 8 -> aligned views) --
R_W1 = 0                                  # [D_PAD,          H_OBJ ]  cols 0:64
R_W2 = R_W1 + D_PAD                       # [H_OBJ,          C_OBJ ]  cols 0:64
R_WENC = R_W2 + H_OBJ                     # [HAND_PAD+C_OBJ, H_ENC ]  cols 0:128
R_WHEAD = R_WENC + HAND_PAD + C_OBJ       # [H_ENC,        2*Z_DIM ]  cols 0:256
R_WDEC1 = R_WHEAD + H_ENC                 # [Z_DIM+C_OBJ,    H_DEC ]  cols 0:128
R_WDEC2 = R_WDEC1 + Z_DIM + C_OBJ         # [H_DEC,         OUT_PAD]  cols 0:64
W_ROWS = R_WDEC2 + H_DEC                  # 648
W_COLS = 2 * Z_DIM                        # 256 (widest block)

# ---- packed bias-slab column offsets ---------------------------------------
C_B1 = 0
C_B2 = C_B1 + H_OBJ
C_BENC = C_B2 + C_OBJ
C_BHEAD = C_BENC + H_ENC
C_BDEC1 = C_BHEAD + 2 * Z_DIM
C_BDEC2 = C_BDEC1 + H_DEC
B_COLS = 768                              # 704 used, padded to 6*128 lanes


def _halo_vae_kernel(obj_ref, hand_ref, w_ref, b_ref, out_ref):
    f32 = jnp.float32
    bsz = hand_ref.shape[0]
    n = obj_ref.shape[0] // bsz

    # ---- obj_encoder: per-point MLP then PointNet max-pool over points ----
    pts = obj_ref[...]                                               # [B*N, D_PAD]
    h1 = jnp.dot(pts, w_ref[R_W1:R_W1 + D_PAD, 0:H_OBJ],
                 preferred_element_type=f32) + b_ref[:, C_B1:C_B1 + H_OBJ]
    h1 = jnp.maximum(h1, 0.0)
    h2 = jnp.dot(h1, w_ref[R_W2:R_W2 + H_OBJ, 0:C_OBJ],
                 preferred_element_type=f32) + b_ref[:, C_B2:C_B2 + C_OBJ]
    # single reshaped cross-sublane reduce instead of per-batch slices/concat
    c = jnp.max(h2.reshape(bsz, n, C_OBJ), axis=1)                   # [B, C_OBJ]

    # ---- encoder_latent(hand, c): fused [hand | c] @ [Wh ; Wc] ----
    x_enc = jnp.concatenate([hand_ref[...], c], axis=-1)             # [B, 128]
    he = jnp.dot(x_enc, w_ref[R_WENC:R_WENC + HAND_PAD + C_OBJ, 0:H_ENC],
                 preferred_element_type=f32) + b_ref[:, C_BENC:C_BENC + H_ENC]
    he = jnp.maximum(he, 0.0)

    # ---- fused mean / logstd heads: one [128, 256] matmul ----
    heads = jnp.dot(he, w_ref[R_WHEAD:R_WHEAD + H_ENC, 0:2 * Z_DIM],
                    preferred_element_type=f32) + b_ref[:, C_BHEAD:C_BHEAD + 2 * Z_DIM]
    # forward(): q_z = Normal(mean_z, exp(logstd_z)); z = q_z.mean
    mean_z = heads[:, 0:Z_DIM]

    # ---- decoder(z, c): fused [z | c] @ [Wz ; Wc] ----
    x_dec = jnp.concatenate([mean_z, c], axis=-1)                    # [B, 192]
    hd = jnp.dot(x_dec, w_ref[R_WDEC1:R_WDEC1 + Z_DIM + C_OBJ, 0:H_DEC],
                 preferred_element_type=f32) + b_ref[:, C_BDEC1:C_BDEC1 + H_DEC]
    hd = jnp.maximum(hd, 0.0)
    pred = jnp.dot(hd, w_ref[R_WDEC2:R_WDEC2 + H_DEC, 0:OUT_PAD],
                   preferred_element_type=f32) + b_ref[:, C_BDEC2:C_BDEC2 + OUT_PAD]

    # single lane-dense output slab: [mu(128) | logstd(128) | pred(64) | c(64)]
    out_ref[...] = jnp.concatenate([heads, pred, c], axis=-1)


def init_params(key):
    """Build the packed (weight_slab, bias_slab).  Packing runs once at init;
    the kernel takes static views, so pallas_call sees only 2 param operands."""
    ks = jax.random.split(key, 9)

    def w(k, shape, scale=0.1):
        return (scale * jax.random.normal(k, shape)).astype(jnp.float32)

    # obj_encoder (xyz rows 3:8 are zero so the 3->8 input pad is exact)
    w1 = jnp.zeros((D_PAD, H_OBJ), jnp.float32).at[:3, :].set(w(ks[0], (3, H_OBJ)))
    w2 = w(ks[1], (H_OBJ, C_OBJ))
    # encoder_latent, fused over [hand ; c]; hand row 63 is padding -> zero
    weh = jnp.zeros((HAND_PAD, H_ENC), jnp.float32).at[:J * 3, :].set(
        w(ks[2], (J * 3, H_ENC)))
    wec = w(ks[3], (C_OBJ, H_ENC))
    w_enc = jnp.concatenate([weh, wec], axis=0)                       # [128, 128]
    # fused mean | logstd heads
    w_heads = jnp.concatenate([w(ks[4], (H_ENC, Z_DIM)),
                               w(ks[5], (H_ENC, Z_DIM))], axis=1)     # [128, 256]
    # decoder, fused over [z ; c]; output column 63 is padding -> zero
    w_dec1 = jnp.concatenate([w(ks[6], (Z_DIM, H_DEC)),
                              w(ks[7], (C_OBJ, H_DEC))], axis=0)      # [192, 128]
    w_dec2 = jnp.zeros((H_DEC, OUT_PAD), jnp.float32).at[:, :J * 3].set(
        w(ks[8], (H_DEC, J * 3)))

    w_slab = jnp.zeros((W_ROWS, W_COLS), jnp.float32)
    w_slab = w_slab.at[R_W1:R_W1 + D_PAD, 0:H_OBJ].set(w1)
    w_slab = w_slab.at[R_W2:R_W2 + H_OBJ, 0:C_OBJ].set(w2)
    w_slab = w_slab.at[R_WENC:R_WENC + HAND_PAD + C_OBJ, 0:H_ENC].set(w_enc)
    w_slab = w_slab.at[R_WHEAD:R_WHEAD + H_ENC, 0:2 * Z_DIM].set(w_heads)
    w_slab = w_slab.at[R_WDEC1:R_WDEC1 + Z_DIM + C_OBJ, 0:H_DEC].set(w_dec1)
    w_slab = w_slab.at[R_WDEC2:R_WDEC2 + H_DEC, 0:OUT_PAD].set(w_dec2)

    # all biases zero-initialized; the slab keeps the layout a real checkpoint
    # would pack into (b1|b2|b_enc|b_heads|b_dec1|b_dec2, zero-padded to 768)
    b_slab = jnp.zeros((1, B_COLS), jnp.float32)
    return w_slab, b_slab


def halo_vae_forward(obj_points, hand_joints, params):
    """Returns (pred_joints, mean_z, logstd_z, object_latent)."""
    w_slab, b_slab = params
    bsz, n_pts, d = obj_points.shape

    # pad xyz 3 -> D_PAD and flatten points into rows: [B*N, D_PAD]
    obj_p = jnp.pad(obj_points.astype(jnp.float32), ((0, 0), (0, 0), (0, D_PAD - d)))
    obj_p = obj_p.reshape(bsz * n_pts, D_PAD)
    # flatten hand joints and pad 63 -> 64
    hand_flat = hand_joints.reshape(bsz, -1).astype(jnp.float32)
    hand_flat = jnp.pad(hand_flat, ((0, 0), (0, HAND_PAD - hand_flat.shape[-1])))

    vmem = pl.BlockSpec(memory_space=pltpu.MemorySpace.VMEM)
    out = pl.pallas_call(
        _halo_vae_kernel,
        out_shape=jax.ShapeDtypeStruct((bsz, OUT_SLAB), jnp.float32),
        in_specs=[vmem, vmem, vmem, vmem],
        out_specs=vmem,
    )(obj_p, hand_flat, w_slab, b_slab)

    mean_z = out[:, 0:Z_DIM]
    logstd_z = out[:, Z_DIM:2 * Z_DIM]
    pred_joints = out[:, 2 * Z_DIM:2 * Z_DIM + J * 3].reshape(bsz, J, 3)
    obj_latent = out[:, 2 * Z_DIM + OUT_PAD:2 * Z_DIM + OUT_PAD + C_OBJ]
    return pred_joints, mean_z, logstd_z, obj_latent


if __name__ == "__main__":
    key = jax.random.PRNGKey(0)
    k_obj, k_hand, k_params = jax.random.split(key, 3)

    obj_points = jax.random.normal(k_obj, (B, N_PTS, 3), dtype=jnp.float32)
    hand_joints = jax.random.normal(k_hand, (B, J, 3), dtype=jnp.float32)
    params = init_params(k_params)

    pred, mean_z, logstd_z, c = halo_vae_forward(obj_points, hand_joints, params)
    jax.block_until_ready((pred, mean_z, logstd_z, c))

    assert pred.shape == (B, J, 3)
    assert mean_z.shape == (B, Z_DIM)
    assert logstd_z.shape == (B, Z_DIM)
    assert c.shape == (B, C_OBJ)
    print("KERNEL_OK")
</pallas_src>

<mosaic_0001>
module attributes {stable_mosaic.version = 11 : i64} {
  func.func @_halo_vae_kernel(%arg0: memref<128x8xf32, #tpu.memory_space<vmem>>, %arg1: memref<2x64xf32, #tpu.memory_space<vmem>>, %arg2: memref<648x256xf32, #tpu.memory_space<vmem>>, %arg3: memref<1x768xf32, #tpu.memory_space<vmem>>, %arg4: memref<2x384xf32, #tpu.memory_space<vmem>>) attributes {dimension_semantics = [], scalar_prefetch = 0 : i64, scratch_operands = 0 : i64, tpu.core_type = #tpu.core_type<tc>} {
    %c0 = arith.constant 0 : index
    %c0_0 = arith.constant 0 : index
    %0 = vector.load %arg0[%c0, %c0_0] : memref<128x8xf32, #tpu.memory_space<vmem>>, vector<128x8xf32>
    %c0_1 = arith.constant 0 : index
    %c0_2 = arith.constant 0 : index
    %1 = vector.load %arg2[%c0_1, %c0_2] : memref<648x256xf32, #tpu.memory_space<vmem>>, vector<8x64xf32>
    %cst = arith.constant dense<0.000000e+00> : vector<128x64xf32>
    %2 = tpu.matmul %0, %1, %cst {dimension_numbers = #tpu.dot_dimension_numbers<[1], [0], [0], [1], [0, 0, 1, 1], [], []>} : vector<128x8xf32>, vector<8x64xf32>, vector<128x64xf32> -> vector<128x64xf32>
    %c0_3 = arith.constant 0 : index
    %c0_4 = arith.constant 0 : index
    %3 = vector.load %arg3[%c0_3, %c0_4] : memref<1x768xf32, #tpu.memory_space<vmem>>, vector<1x64xf32>
    %4 = vector.broadcast %3 : vector<1x64xf32> to vector<128x64xf32>
    %5 = arith.addf %2, %4 : vector<128x64xf32>
    %cst_5 = arith.constant 0.000000e+00 : f32
    %6 = vector.broadcast %cst_5 : f32 to vector<128x64xf32>
    %7 = arith.maximumf %5, %6 : vector<128x64xf32>
    %c8 = arith.constant 8 : index
    %c0_6 = arith.constant 0 : index
    %8 = vector.load %arg2[%c8, %c0_6] : memref<648x256xf32, #tpu.memory_space<vmem>>, vector<64x64xf32>
    %cst_7 = arith.constant dense<0.000000e+00> : vector<128x64xf32>
    %9 = tpu.matmul %7, %8, %cst_7 {dimension_numbers = #tpu.dot_dimension_numbers<[1], [0], [0], [1], [0, 0, 1, 1], [], []>} : vector<128x64xf32>, vector<64x64xf32>, vector<128x64xf32> -> vector<128x64xf32>
    %c0_8 = arith.constant 0 : index
    %c64 = arith.constant 64 : index
    %10 = vector.load %arg3[%c0_8, %c64] : memref<1x768xf32, #tpu.memory_space<vmem>>, vector<1x64xf32>
    %11 = vector.broadcast %10 : vector<1x64xf32> to vector<128x64xf32>
    %12 = arith.addf %9, %11 : vector<128x64xf32>
    %13 = vector.shape_cast %12 : vector<128x64xf32> to vector<2x64x64xf32>
    %cst_9 = arith.constant dense<0xFF800000> : vector<2x64xf32>
    %14 = vector.multi_reduction <maximumf>, %13, %cst_9 [1] : vector<2x64x64xf32> to vector<2x64xf32>
    %c0_10 = arith.constant 0 : index
    %c0_11 = arith.constant 0 : index
    %15 = vector.load %arg1[%c0_10, %c0_11] : memref<2x64xf32, #tpu.memory_space<vmem>>, vector<2x64xf32>
    %16 = tpu.concatenate %15, %14 in 1 : vector<2x64xf32>, vector<2x64xf32> -> vector<2x128xf32>
    %c72 = arith.constant 72 : index
    %c0_12 = arith.constant 0 : index
    %17 = vector.load %arg2[%c72, %c0_12] : memref<648x256xf32, #tpu.memory_space<vmem>>, vector<128x128xf32>
    %cst_13 = arith.constant dense<0.000000e+00> : vector<2x128xf32>
    %18 = tpu.matmul %16, %17, %cst_13 {dimension_numbers = #tpu.dot_dimension_numbers<[1], [0], [0], [1], [0, 0, 1, 1], [], []>} : vector<2x128xf32>, vector<128x128xf32>, vector<2x128xf32> -> vector<2x128xf32>
    %c0_14 = arith.constant 0 : index
    %c128 = arith.constant 128 : index
    %19 = vector.load %arg3[%c0_14, %c128] : memref<1x768xf32, #tpu.memory_space<vmem>>, vector<1x128xf32>
    %20 = vector.broadcast %19 : vector<1x128xf32> to vector<2x128xf32>
    %21 = arith.addf %18, %20 : vector<2x128xf32>
    %cst_15 = arith.constant 0.000000e+00 : f32
    %22 = vector.broadcast %cst_15 : f32 to vector<2x128xf32>
    %23 = arith.maximumf %21, %22 : vector<2x128xf32>
    %c200 = arith.constant 200 : index
    %c0_16 = arith.constant 0 : index
    %24 = vector.load %arg2[%c200, %c0_16] : memref<648x256xf32, #tpu.memory_space<vmem>>, vector<128x256xf32>
    %cst_17 = arith.constant dense<0.000000e+00> : vector<2x256xf32>
    %25 = tpu.matmul %23, %24, %cst_17 {dimension_numbers = #tpu.dot_dimension_numbers<[1], [0], [0], [1], [0, 0, 1, 1], [], []>} : vector<2x128xf32>, vector<128x256xf32>, vector<2x256xf32> -> vector<2x256xf32>
    %c0_18 = arith.constant 0 : index
    %c256 = arith.constant 256 : index
    %26 = vector.load %arg3[%c0_18, %c256] : memref<1x768xf32, #tpu.memory_space<vmem>>, vector<1x256xf32>
    %27 = vector.broadcast %26 : vector<1x256xf32> to vector<2x256xf32>
    %28 = arith.addf %25, %27 : vector<2x256xf32>
    %29 = vector.extract_strided_slice %28 {offsets = [0, 0], sizes = [2, 128], strides = [1, 1]} : vector<2x256xf32> to vector<2x128xf32>
    %30 = tpu.concatenate %29, %14 in 1 : vector<2x128xf32>, vector<2x64xf32> -> vector<2x192xf32>
    %c328 = arith.constant 328 : index
    %c0_19 = arith.constant 0 : index
    %31 = vector.load %arg2[%c328, %c0_19] : memref<648x256xf32, #tpu.memory_space<vmem>>, vector<192x128xf32>
    %cst_20 = arith.constant dense<0.000000e+00> : vector<2x128xf32>
    %32 = tpu.matmul %30, %31, %cst_20 {dimension_numbers = #tpu.dot_dimension_numbers<[1], [0], [0], [1], [0, 0, 1, 1], [], []>} : vector<2x192xf32>, vector<192x128xf32>, vector<2x128xf32> -> vector<2x128xf32>
    %c0_21 = arith.constant 0 : index
    %c512 = arith.constant 512 : index
    %33 = vector.load %arg3[%c0_21, %c512] : memref<1x768xf32, #tpu.memory_space<vmem>>, vector<1x128xf32>
    %34 = vector.broadcast %33 : vector<1x128xf32> to vector<2x128xf32>
    %35 = arith.addf %32, %34 : vector<2x128xf32>
    %cst_22 = arith.constant 0.000000e+00 : f32
    %36 = vector.broadcast %cst_22 : f32 to vector<2x128xf32>
    %37 = arith.maximumf %35, %36 : vector<2x128xf32>
    %c520 = arith.constant 520 : index
    %c0_23 = arith.constant 0 : index
    %38 = vector.load %arg2[%c520, %c0_23] : memref<648x256xf32, #tpu.memory_space<vmem>>, vector<128x64xf32>
    %cst_24 = arith.constant dense<0.000000e+00> : vector<2x64xf32>
    %39 = tpu.matmul %37, %38, %cst_24 {dimension_numbers = #tpu.dot_dimension_numbers<[1], [0], [0], [1], [0, 0, 1, 1], [], []>} : vector<2x128xf32>, vector<128x64xf32>, vector<2x64xf32> -> vector<2x64xf32>
    %c0_25 = arith.constant 0 : index
    %c640 = arith.constant 640 : index
    %40 = vector.load %arg3[%c0_25, %c640] : memref<1x768xf32, #tpu.memory_space<vmem>>, vector<1x64xf32>
    %41 = vector.broadcast %40 : vector<1x64xf32> to vector<2x64xf32>
    %42 = arith.addf %39, %41 : vector<2x64xf32>
    %43 = tpu.concatenate %28, %42, %14 in 1 : vector<2x256xf32>, vector<2x64xf32>, vector<2x64xf32> -> vector<2x384xf32>
    %c0_26 = arith.constant 0 : index
    %c0_27 = arith.constant 0 : index
    %44 = vector.load %arg4[%c0_26, %c0_27] : memref<2x384xf32, #tpu.memory_space<vmem>>, vector<2x384xf32>
    tpu.vector_store %arg4[%c0_26, %c0_27], %43 {strides = array<i32>} : memref<2x384xf32, #tpu.memory_space<vmem>>, vector<2x384xf32>,
    return
  }
}

</mosaic_0001>

<llo_original>
// kernel: tpu_custom_call.1
$region0: #{tpu_custom_call.1}
  #allocation0 [shape = 'u32[]', space=smem, size = 0x4, offset = 0x4, fixed_abs, tag = 'smem constant byte address 0x4 - core index']
  #allocation1 [shape = 'u32[72,128]{1,0:T(1,128)}', space=vmem, size = 0x9000, scoped, tag = 'internal scratch']
  %s0 = inlined_call_operand.vmem [shape: f32[128,8], index: 0, kind: input, shape index: {}]
  %s1 = inlined_call_operand.vmem [shape: f32[2,64], index: 1, kind: input, shape index: {}]
  %s2 = inlined_call_operand.hbm [shape: f32[648,256], index: 2, kind: input, shape index: {}]
  %s3 = inlined_call_operand.vmem [shape: f32[1,768], index: 3, kind: input, shape index: {}]
  %s4 = inlined_call_operand.hbm [shape: f32[2,384], index: 4, kind: output, shape index: {}]
  %s5 = sld [smem:[#allocation0]]
  $region30: #{tpu_custom_call.1} parent=0
    _
  %s7 = ssub.s32 1, %s5
  %s8 = scalar_select 0, %s7, %s5
  $region1: #{tpu_custom_call.1} parent=0
    #allocation2 [shape = 'u8[663552]{0}', space=vmem, size = 0xa2000, scoped, tag = 'input window, operand 2, single buffered']
    #allocation3 [shape = 's32[1]{0}', space=sflag, size = 0x4, scoped, tag = 'scoped memory for tpu_custom_call.1']
    #allocation4 [shape = 's32[1]{0}', space=sflag, size = 0x4, scoped, tag = 'scoped memory for tpu_custom_call.1']
    #allocation5 [shape = 'u8[3072]{0}', space=vmem, size = 0xc00, scoped, tag = 'output window, operand 0, single buffered']
    %9 = vsyncpa [#allocation3], 0
    %10 = vsyncpa [#allocation4], 0
    // Predicated region
    $region2: #{tpu_custom_call.1} parent=1 // pred_check
      _
    $region3: #{tpu_custom_call.1} parent=1 // pred_check_branch
      %12 = sbr.rel (0) target = $region5
    $region4: #{tpu_custom_call.1} parent=1 // pred_region
      _
    $region5: #{tpu_custom_call.1} parent=1 // pred_fallthru
      _
    // Predicated region
    $region6: #{tpu_custom_call.1} parent=1 // pred_check
      _
    $region7: #{tpu_custom_call.1} parent=1 // pred_check_branch
      %14 = sbr.rel (0) target = $region9
    $region8: #{tpu_custom_call.1} parent=1 // pred_region
      _
    $region9: #{tpu_custom_call.1} parent=1 // pred_fallthru
      _
    // Predicated region
    $region10: #{tpu_custom_call.1} parent=1 // pred_check
      _
    $region11: #{tpu_custom_call.1} parent=1 // pred_check_branch
      %16 = sbr.rel (0) target = $region13
    $region12: #{tpu_custom_call.1} parent=1 // pred_region
      %18 = vsyncadd [#allocation3], 0
      %s19 = sshll.u32 %s2, 4
      %s20 = int_to_ptr.hbm [resolvable:$true] %s19
      %s21 = sshll.u32 [#allocation2], 4
      %s22 = int_to_ptr.vmem [resolvable:$true] %s21
      %27 = dma.hbm_to_vmem [thread:$0]  %s20, 20736, %s22, [#allocation3], 256, 256, 16
    $region13: #{tpu_custom_call.1} parent=1 // pred_fallthru
      _
    // Predicated region
    $region14: #{tpu_custom_call.1} parent=1 // pred_check
      _
    $region15: #{tpu_custom_call.1} parent=1 // pred_check_branch
      %29 = sbr.rel (0) target = $region17
    $region16: #{tpu_custom_call.1} parent=1 // pred_region
      _
    $region17: #{tpu_custom_call.1} parent=1 // pred_fallthru
      _
    // Predicated region
    $region18: #{tpu_custom_call.1} parent=1 // pred_check
      _
    $region19: #{tpu_custom_call.1} parent=1 // pred_check_branch
      %31 = sbr.rel (0) target = $region21
    $region20: #{tpu_custom_call.1} parent=1 // pred_region
      %33 = dma.done [#allocation3], 20736
    $region21: #{tpu_custom_call.1} parent=1 // pred_fallthru
      _
    %v34 = vld [vmem:[%s0] sm:$0xff]
    %v35 = vld [vmem:[%s0 + $0x8] sm:$0xff]
    %v36 = vld [vmem:[%s0 + $0x10] sm:$0xff]
    %v37 = vld [vmem:[%s0 + $0x18] sm:$0xff]
    %v38 = vld [vmem:[%s0 + $0x20] sm:$0xff]
    %v39 = vld [vmem:[%s0 + $0x28] sm:$0xff]
    %v40 = vld [vmem:[%s0 + $0x30] sm:$0xff]
    %v41 = vld [vmem:[%s0 + $0x38] sm:$0xff]
    %v42 = vld [vmem:[%s0 + $0x40] sm:$0xff]
    %v43 = vld [vmem:[%s0 + $0x48] sm:$0xff]
    %v44 = vld [vmem:[%s0 + $0x50] sm:$0xff]
    %v45 = vld [vmem:[%s0 + $0x58] sm:$0xff]
    %v46 = vld [vmem:[%s0 + $0x60] sm:$0xff]
    %v47 = vld [vmem:[%s0 + $0x68] sm:$0xff]
    %v48 = vld [vmem:[%s0 + $0x70] sm:$0xff]
    %v49 = vld [vmem:[%s0 + $0x78] sm:$0xff]
    %v50 = vld [vmem:[#allocation2] sm:$0xff]
    %v51 = vld [vmem:[%s3] sm:$0x1]
    %v53 = vperm.slane %v51, 0
    %vm55 = vcmask 64512
    %v57 = vsel %vm55, %v34, 0
    %v60 = vsel %vm55, %v35, 0
    %v63 = vsel %vm55, %v36, 0
    %v66 = vsel %vm55, %v37, 0
    %v69 = vsel %vm55, %v38, 0
    %v72 = vsel %vm55, %v39, 0
    %v75 = vsel %vm55, %v40, 0
    %v78 = vsel %vm55, %v41, 0
    %v81 = vsel %vm55, %v42, 0
    %v84 = vsel %vm55, %v43, 0
    %v87 = vsel %vm55, %v44, 0
    %v90 = vsel %vm55, %v45, 0
    %v93 = vsel %vm55, %v46, 0
    %v96 = vsel %vm55, %v47, 0
    %v99 = vsel %vm55, %v48, 0
    %v102 = vsel %vm55, %v49, 0
    %104 = vmatpush.msra.mxu0 0.0
    %105 = vmatpush.msra.mxu0 0.0
    %106 = vmatpush.msra.mxu0 0.0
    %107 = vmatpush.msra.mxu0 0.0
    %108 = vmatpush.msra.mxu0 0.0
    %109 = vmatpush.msra.mxu0 0.0
    %110 = vmatpush.msra.mxu0 0.0
    %111 = vmatpush.msra.mxu0 0.0
    %112 = vmatpush.msra.mxu0 0.0
    %113 = vmatpush.msra.mxu0 0.0
    %114 = vmatpush.msra.mxu0 0.0
    %115 = vmatpush.msra.mxu0 0.0
    %116 = vmatpush.msra.mxu0 0.0
    %117 = vmatpush.msra.mxu0 0.0
    %118 = vmatpush.msra.mxu0 0.0
    %119 = vmatpush.msra.mxu0 %v50
    %120 = vmatmul.f32.gmra.mxu0 %v57
    %v121 = vpop.f32.mrf.mxu0
    %v122 = vadd.f32 %v53, %v121
    %123 = vmatmul.f32.gmra.mxu0 %v60
    %v124 = vpop.f32.mrf.mxu0
    %v125 = vadd.f32 %v53, %v124
    %126 = vmatmul.f32.gmra.mxu0 %v63
    %v127 = vpop.f32.mrf.mxu0
    %v128 = vadd.f32 %v53, %v127
    %129 = vmatmul.f32.gmra.mxu0 %v66
    %v130 = vpop.f32.mrf.mxu0
    %v131 = vadd.f32 %v53, %v130
    %132 = vmatmul.f32.gmra.mxu0 %v69
    %v133 = vpop.f32.mrf.mxu0
    %v134 = vadd.f32 %v53, %v133
    %135 = vmatmul.f32.gmra.mxu0 %v72
    %v136 = vpop.f32.mrf.mxu0
    %v137 = vadd.f32 %v53, %v136
    %138 = vmatmul.f32.gmra.mxu0 %v75
    %v139 = vpop.f32.mrf.mxu0
    %v140 = vadd.f32 %v53, %v139
    %141 = vmatmul.f32.gmra.mxu0 %v78
    %v142 = vpop.f32.mrf.mxu0
    %v143 = vadd.f32 %v53, %v142
    %144 = vmatmul.f32.gmra.mxu0 %v81
    %v145 = vpop.f32.mrf.mxu0
    %v146 = vadd.f32 %v53, %v145
    %147 = vmatmul.f32.gmra.mxu0 %v84
    %v148 = vpop.f32.mrf.mxu0
    %v149 = vadd.f32 %v53, %v148
    %150 = vmatmul.f32.gmra.mxu0 %v87
    %v151 = vpop.f32.mrf.mxu0
    %v152 = vadd.f32 %v53, %v151
    %153 = vmatmul.f32.gmra.mxu0 %v90
    %v154 = vpop.f32.mrf.mxu0
    %v155 = vadd.f32 %v53, %v154
    %156 = vmatmul.f32.gmra.mxu0 %v93
    %v157 = vpop.f32.mrf.mxu0
    %v158 = vadd.f32 %v53, %v157
    %159 = vmatmul.f32.gmra.mxu0 %v96
    %v160 = vpop.f32.mrf.mxu0
    %v161 = vadd.f32 %v53, %v160
    %162 = vmatmul.f32.gmra.mxu0 %v99
    %v163 = vpop.f32.mrf.mxu0
    %v164 = vadd.f32 %v53, %v163
    %165 = vmatmul.f32.gmra.mxu0 %v102
    %v166 = vpop.f32.mrf.mxu0
    %v167 = vadd.f32 %v53, %v166
    %168 = vdwg.mxu0
    %v169 = vmax.f32 %v122, 0.0
    %v170 = vmax.f32 %v125, 0.0
    %v171 = vmax.f32 %v128, 0.0
    %v172 = vmax.f32 %v131, 0.0
    %v173 = vmax.f32 %v134, 0.0
    %v174 = vmax.f32 %v137, 0.0
    %v175 = vmax.f32 %v140, 0.0
    %v176 = vmax.f32 %v143, 0.0
    %v177 = vmax.f32 %v146, 0.0
    %v178 = vmax.f32 %v149, 0.0
    %v179 = vmax.f32 %v152, 0.0
    %v180 = vmax.f32 %v155, 0.0
    %v181 = vmax.f32 %v158, 0.0
    %v182 = vmax.f32 %v161, 0.0
    %v183 = vmax.f32 %v164, 0.0
    %v184 = vmax.f32 %v167, 0.0
    %v185 = vld [vmem:[#allocation2 + $0x10] sm:$0xff]
    %v186 = vld [vmem:[#allocation2 + $0x20] sm:$0xff]
    %v187 = vld [vmem:[#allocation2 + $0x30] sm:$0xff]
    %v188 = vld [vmem:[#allocation2 + $0x40] sm:$0xff]
    %v189 = vld [vmem:[#allocation2 + $0x50] sm:$0xff]
    %v190 = vld [vmem:[#allocation2 + $0x60] sm:$0xff]
    %v191 = vld [vmem:[#allocation2 + $0x70] sm:$0xff]
    %v192 = vld [vmem:[#allocation2 + $0x80] sm:$0xff]
    %193 = vrot.lane.b32.xlu0 %v53, 64
    %v194 = vpop.permute.xlu0 %193
    %vm196 = vcmask 523264
    %v198 = vsel %vm196, %v169, 0
    %v201 = vsel %vm196, %v170, 0
    %v204 = vsel %vm196, %v171, 0
    %v207 = vsel %vm196, %v172, 0
    %v210 = vsel %vm196, %v173, 0
    %v213 = vsel %vm196, %v174, 0
    %v216 = vsel %vm196, %v175, 0
    %v219 = vsel %vm196, %v176, 0
    %v222 = vsel %vm196, %v177, 0
    %v225 = vsel %vm196, %v178, 0
    %v228 = vsel %vm196, %v179, 0
    %v231 = vsel %vm196, %v180, 0
    %v234 = vsel %vm196, %v181, 0
    %v237 = vsel %vm196, %v182, 0
    %v240 = vsel %vm196, %v183, 0
    %v243 = vsel %vm196, %v184, 0
    %245 = vmatpush.msra.mxu0 0.0
    %246 = vmatpush.msra.mxu0 0.0
    %247 = vmatpush.msra.mxu0 0.0
    %248 = vmatpush.msra.mxu0 0.0
    %249 = vmatpush.msra.mxu0 0.0
    %250 = vmatpush.msra.mxu0 0.0
    %251 = vmatpush.msra.mxu0 0.0
    %252 = vmatpush.msra.mxu0 0.0
    %253 = vmatpush.msra.mxu0 %v192
    %254 = vmatpush.msra.mxu0 %v191
    %255 = vmatpush.msra.mxu0 %v190
    %256 = vmatpush.msra.mxu0 %v189
    %257 = vmatpush.msra.mxu0 %v188
    %258 = vmatpush.msra.mxu0 %v187
    %259 = vmatpush.msra.mxu0 %v186
    %260 = vmatpush.msra.mxu0 %v185
    %261 = vmatmul.f32.gmra.mxu0 %v198
    %v262 = vpop.f32.mrf.mxu0
    %v263 = vadd.f32 %v194, %v262
    %264 = vmatmul.f32.gmra.mxu0 %v201
    %v265 = vpop.f32.mrf.mxu0
    %v266 = vadd.f32 %v194, %v265
    %267 = vmatmul.f32.gmra.mxu0 %v204
    %v268 = vpop.f32.mrf.mxu0
    %v269 = vadd.f32 %v194, %v268
    %270 = vmatmul.f32.gmra.mxu0 %v207
    %v271 = vpop.f32.mrf.mxu0
    %v272 = vadd.f32 %v194, %v271
    %273 = vmatmul.f32.gmra.mxu0 %v210
    %v274 = vpop.f32.mrf.mxu0
    %v275 = vadd.f32 %v194, %v274
    %276 = vmatmul.f32.gmra.mxu0 %v213
    %v277 = vpop.f32.mrf.mxu0
    %v278 = vadd.f32 %v194, %v277
    %279 = vmatmul.f32.gmra.mxu0 %v216
    %v280 = vpop.f32.mrf.mxu0
    %v281 = vadd.f32 %v194, %v280
    %282 = vmatmul.f32.gmra.mxu0 %v219
    %v283 = vpop.f32.mrf.mxu0
    %v284 = vadd.f32 %v194, %v283
    %285 = vmatmul.f32.gmra.mxu0 %v222
    %v286 = vpop.f32.mrf.mxu0
    %v287 = vadd.f32 %v194, %v286
    %288 = vmatmul.f32.gmra.mxu0 %v225
    %v289 = vpop.f32.mrf.mxu0
    %v290 = vadd.f32 %v194, %v289
    %291 = vmatmul.f32.gmra.mxu0 %v228
    %v292 = vpop.f32.mrf.mxu0
    %v293 = vadd.f32 %v194, %v292
    %294 = vmatmul.f32.gmra.mxu0 %v231
    %v295 = vpop.f32.mrf.mxu0
    %v296 = vadd.f32 %v194, %v295
    %297 = vmatmul.f32.gmra.mxu0 %v234
    %v298 = vpop.f32.mrf.mxu0
    %v299 = vadd.f32 %v194, %v298
    %300 = vmatmul.f32.gmra.mxu0 %v237
    %v301 = vpop.f32.mrf.mxu0
    %v302 = vadd.f32 %v194, %v301
    %303 = vmatmul.f32.gmra.mxu0 %v240
    %v304 = vpop.f32.mrf.mxu0
    %v305 = vadd.f32 %v194, %v304
    %306 = vmatmul.f32.gmra.mxu0 %v243
    %v307 = vpop.f32.mrf.mxu0
    %v308 = vadd.f32 %v194, %v307
    %309 = vdwg.mxu0
    %v310 = vsel %vm196, %v263, -inf
    %v311 = vsel %vm196, %v266, -inf
    %v312 = vsel %vm196, %v269, -inf
    %v313 = vmax.f32 %v310, %v312
    %v314 = vsel %vm196, %v272, -inf
    %v315 = vmax.f32 %v311, %v314
    %v316 = vsel %vm196, %v275, -inf
    %v317 = vmax.f32 %v313, %v316
    %v318 = vsel %vm196, %v278, -inf
    %v319 = vmax.f32 %v315, %v318
    %v320 = vsel %vm196, %v281, -inf
    %v321 = vmax.f32 %v317, %v320
    %v322 = vsel %vm196, %v284, -inf
    %v323 = vmax.f32 %v319, %v322
    %v324 = vmax.f32 %v321, %v323
    %v325 = vrot.slane %v324, 4
    %v326 = vmax.f32 %v324, %v325
    %v327 = vrot.slane %v326, 2
    %v328 = vmax.f32 %v326, %v327
    %v329 = vrot.slane %v328, 1
    %v330 = vmax.f32 %v328, %v329
    %v331 = vsel %vm196, %v287, -inf
    %v332 = vsel %vm196, %v290, -inf
    %v333 = vsel %vm196, %v293, -inf
    %v334 = vmax.f32 %v331, %v333
    %v335 = vsel %vm196, %v296, -inf
    %v336 = vmax.f32 %v332, %v335
    %v337 = vsel %vm196, %v299, -inf
    %v338 = vmax.f32 %v334, %v337
    %v339 = vsel %vm196, %v302, -inf
    %v340 = vmax.f32 %v336, %v339
    %v341 = vsel %vm196, %v305, -inf
    %v342 = vmax.f32 %v338, %v341
    %v343 = vsel %vm196, %v308, -inf
    %v344 = vmax.f32 %v340, %v343
    %v345 = vmax.f32 %v342, %v344
    %v346 = vrot.slane %v345, 4
    %v347 = vmax.f32 %v345, %v346
    %v348 = vrot.slane %v347, 2
    %v349 = vmax.f32 %v347, %v348
    %v350 = vrot.slane %v349, 1
    %v351 = vmax.f32 %v349, %v350
    %v352 = vld [vmem:[%s1] sm:$0x3]
    %vm355 = vcmask 1041409
    %v356 = vsel %vm355, %v351, %v330
    %357 = vrot.lane.b32.xlu0 %v356, 64
    %v358 = vpop.permute.xlu0 %357
    %v360 = vsel %vm196, %v352, %v358
    %v361 = vld [vmem:[#allocation2 + $0x90] sm:$0xff]
    %v362 = vld [vmem:[#allocation2 + $0xa0] sm:$0xff]
    %v363 = vld [vmem:[#allocation2 + $0xb0] sm:$0xff]
    %v364 = vld [vmem:[#allocation2 + $0xc0] sm:$0xff]
    %v365 = vld [vmem:[#allocation2 + $0xd0] sm:$0xff]
    %v366 = vld [vmem:[#allocation2 + $0xe0] sm:$0xff]
    %v367 = vld [vmem:[#allocation2 + $0xf0] sm:$0xff]
    %v368 = vld [vmem:[#allocation2 + $0x100] sm:$0xff]
    %v369 = vld [vmem:[#allocation2 + $0x110] sm:$0xff]
    %v370 = vld [vmem:[#allocation2 + $0x120] sm:$0xff]
    %v371 = vld [vmem:[#allocation2 + $0x130] sm:$0xff]
    %v372 = vld [vmem:[#allocation2 + $0x140] sm:$0xff]
    %v373 = vld [vmem:[#allocation2 + $0x150] sm:$0xff]
    %v374 = vld [vmem:[#allocation2 + $0x160] sm:$0xff]
    %v375 = vld [vmem:[#allocation2 + $0x170] sm:$0xff]
    %v376 = vld [vmem:[#allocation2 + $0x180] sm:$0xff]
    %v377 = vld [vmem:[%s3 + $0x1] sm:$0x1]
    %v379 = vperm.slane %v377, 0
    %381 = vmatpush.msra.mxu0 %v376
    %382 = vmatpush.msra.mxu0 %v375
    %383 = vmatpush.msra.mxu0 %v374
    %384 = vmatpush.msra.mxu0 %v373
    %385 = vmatpush.msra.mxu0 %v372
    %386 = vmatpush.msra.mxu0 %v371
    %387 = vmatpush.msra.mxu0 %v370
    %388 = vmatpush.msra.mxu0 %v369
    %389 = vmatpush.msra.mxu0 %v368
    %390 = vmatpush.msra.mxu0 %v367
    %391 = vmatpush.msra.mxu0 %v366
    %392 = vmatpush.msra.mxu0 %v365
    %393 = vmatpush.msra.mxu0 %v364
    %394 = vmatpush.msra.mxu0 %v363
    %395 = vmatpush.msra.mxu0 %v362
    %396 = vmatpush.msra.mxu0 %v361
    %397 = vmatmul.f32.gmra.mxu0 %v360
    %v398 = vpop.f32.mrf.mxu0
    %v399 = vadd.f32 %v379, %v398
    %400 = vdwg.mxu0
    %v401 = vmax.f32 %v399, 0.0
    %v402 = vld [vmem:[#allocation2 + $0x190] sm:$0xff]
    %v403 = vld [vmem:[#allocation2 + $0x198] sm:$0xff]
    %v404 = vld [vmem:[#allocation2 + $0x1a0] sm:$0xff]
    %v405 = vld [vmem:[#allocation2 + $0x1a8] sm:$0xff]
    %v406 = vld [vmem:[#allocation2 + $0x1b0] sm:$0xff]
    %v407 = vld [vmem:[#allocation2 + $0x1b8] sm:$0xff]
    %v408 = vld [vmem:[#allocation2 + $0x1c0] sm:$0xff]
    %v409 = vld [vmem:[#allocation2 + $0x1c8] sm:$0xff]
    %v410 = vld [vmem:[#allocation2 + $0x1d0] sm:$0xff]
    %v411 = vld [vmem:[#allocation2 + $0x1d8] sm:$0xff]
    %v412 = vld [vmem:[#allocation2 + $0x1e0] sm:$0xff]
    %v413 = vld [vmem:[#allocation2 + $0x1e8] sm:$0xff]
    %v414 = vld [vmem:[#allocation2 + $0x1f0] sm:$0xff]
    %v415 = vld [vmem:[#allocation2 + $0x1f8] sm:$0xff]
    %v416 = vld [vmem:[#allocation2 + $0x200] sm:$0xff]
    %v417 = vld [vmem:[#allocation2 + $0x208] sm:$0xff]
    %v418 = vld [vmem:[#allocation2 + $0x210] sm:$0xff]
    %v419 = vld [vmem:[#allocation2 + $0x218] sm:$0xff]
    %v420 = vld [vmem:[#allocation2 + $0x220] sm:$0xff]
    %v421 = vld [vmem:[#allocation2 + $0x228] sm:$0xff]
    %v422 = vld [vmem:[#allocation2 + $0x230] sm:$0xff]
    %v423 = vld [vmem:[#allocation2 + $0x238] sm:$0xff]
    %v424 = vld [vmem:[#allocation2 + $0x240] sm:$0xff]
    %v425 = vld [vmem:[#allocation2 + $0x248] sm:$0xff]
    %v426 = vld [vmem:[#allocation2 + $0x250] sm:$0xff]
    %v427 = vld [vmem:[#allocation2 + $0x258] sm:$0xff]
    %v428 = vld [vmem:[#allocation2 + $0x260] sm:$0xff]
    %v429 = vld [vmem:[#allocation2 + $0x268] sm:$0xff]
    %v430 = vld [vmem:[#allocation2 + $0x270] sm:$0xff]
    %v431 = vld [vmem:[#allocation2 + $0x278] sm:$0xff]
    %v432 = vld [vmem:[#allocation2 + $0x280] sm:$0xff]
    %v433 = vld [vmem:[#allocation2 + $0x288] sm:$0xff]
    %v434 = vld [vmem:[%s3 + $0x2] sm:$0x3]
    %v436 = vperm.slane %v434, 0
    %v437 = vperm.slane %v434, 1
    %440 = vmatpush.msra.mxu0 %v432
    %441 = vmatpush.msra.mxu0 %v430
    %442 = vmatpush.msra.mxu0 %v428
    %443 = vmatpush.msra.mxu0 %v426
    %444 = vmatpush.msra.mxu0 %v424
    %445 = vmatpush.msra.mxu0 %v422
    %446 = vmatpush.msra.mxu0 %v420
    %447 = vmatpush.msra.mxu0 %v418
    %448 = vmatpush.msra.mxu0 %v416
    %449 = vmatpush.msra.mxu0 %v414
    %450 = vmatpush.msra.mxu0 %v412
    %451 = vmatpush.msra.mxu0 %v410
    %452 = vmatpush.msra.mxu0 %v408
    %453 = vmatpush.msra.mxu0 %v406
    %454 = vmatpush.msra.mxu0 %v404
    %455 = vmatpush.msra.mxu0 %v402
    %456 = vmatmul.f32.gmra.mxu0 %v401
    %v457 = vpop.f32.mrf.mxu0
    %v458 = vadd.f32 %v436, %v457
    %459 = vdwg.mxu0
    %460 = vmatpush.msra.mxu0 %v433
    %461 = vmatpush.msra.mxu0 %v431
    %462 = vmatpush.msra.mxu0 %v429
    %463 = vmatpush.msra.mxu0 %v427
    %464 = vmatpush.msra.mxu0 %v425
    %465 = vmatpush.msra.mxu0 %v423
    %466 = vmatpush.msra.mxu0 %v421
    %467 = vmatpush.msra.mxu0 %v419
    %468 = vmatpush.msra.mxu0 %v417
    %469 = vmatpush.msra.mxu0 %v415
    %470 = vmatpush.msra.mxu0 %v413
    %471 = vmatpush.msra.mxu0 %v411
    %472 = vmatpush.msra.mxu0 %v409
    %473 = vmatpush.msra.mxu0 %v407
    %474 = vmatpush.msra.mxu0 %v405
    %475 = vmatpush.msra.mxu0 %v403
    %476 = vmatmul.f32.gmra.mxu0 %v401
    %v477 = vpop.f32.mrf.mxu0
    %v478 = vadd.f32 %v437, %v477
    %479 = vdwg.mxu0
    %v480 = vld [vmem:[#allocation2 + $0x290] sm:$0xff]
    %v481 = vld [vmem:[#allocation2 + $0x2a0] sm:$0xff]
    %v482 = vld [vmem:[#allocation2 + $0x2b0] sm:$0xff]
    %v483 = vld [vmem:[#allocation2 + $0x2c0] sm:$0xff]
    %v484 = vld [vmem:[#allocation2 + $0x2d0] sm:$0xff]
    %v485 = vld [vmem:[#allocation2 + $0x2e0] sm:$0xff]
    %v486 = vld [vmem:[#allocation2 + $0x2f0] sm:$0xff]
    %v487 = vld [vmem:[#allocation2 + $0x300] sm:$0xff]
    %v488 = vld [vmem:[#allocation2 + $0x310] sm:$0xff]
    %v489 = vld [vmem:[#allocation2 + $0x320] sm:$0xff]
    %v490 = vld [vmem:[#allocation2 + $0x330] sm:$0xff]
    %v491 = vld [vmem:[#allocation2 + $0x340] sm:$0xff]
    %v492 = vld [vmem:[#allocation2 + $0x350] sm:$0xff]
    %v493 = vld [vmem:[#allocation2 + $0x360] sm:$0xff]
    %v494 = vld [vmem:[#allocation2 + $0x370] sm:$0xff]
    %v495 = vld [vmem:[#allocation2 + $0x380] sm:$0xff]
    %v496 = vld [vmem:[#allocation2 + $0x390] sm:$0xff]
    %v497 = vld [vmem:[#allocation2 + $0x3a0] sm:$0xff]
    %v498 = vld [vmem:[#allocation2 + $0x3b0] sm:$0xff]
    %v499 = vld [vmem:[#allocation2 + $0x3c0] sm:$0xff]
    %v500 = vld [vmem:[#allocation2 + $0x3d0] sm:$0xff]
    %v501 = vld [vmem:[#allocation2 + $0x3e0] sm:$0xff]
    %v502 = vld [vmem:[#allocation2 + $0x3f0] sm:$0xff]
    %v503 = vld [vmem:[#allocation2 + $0x400] sm:$0xff]
    %v504 = vld [vmem:[%s3 + $0x4] sm:$0x1]
    %v506 = vperm.slane %v504, 0
    %v508 = vsel %vm196, %v356, 0
    %510 = vmatpush.msra.mxu0 %v495
    %511 = vmatpush.msra.mxu0 %v494
    %512 = vmatpush.msra.mxu0 %v493
    %513 = vmatpush.msra.mxu0 %v492
    %514 = vmatpush.msra.mxu0 %v491
    %515 = vmatpush.msra.mxu0 %v490
    %516 = vmatpush.msra.mxu0 %v489
    %517 = vmatpush.msra.mxu0 %v488
    %518 = vmatpush.msra.mxu0 %v487
    %519 = vmatpush.msra.mxu0 %v486
    %520 = vmatpush.msra.mxu0 %v485
    %521 = vmatpush.msra.mxu0 %v484
    %522 = vmatpush.msra.mxu0 %v483
    %523 = vmatpush.msra.mxu0 %v482
    %524 = vmatpush.msra.mxu0 %v481
    %525 = vmatpush.msra.mxu0 %v480
    %526 = vmatmul.f32.gmra.mxu0 %v458
    %v527 = vpop.f32.mrf.mxu0
    %v528 = vadd.f32 %v506, %v527
    %529 = vdwg.mxu0
    %530 = vmatpush.msra.mxu0 0.0
    %531 = vmatpush.msra.mxu0 0.0
    %532 = vmatpush.msra.mxu0 0.0
    %533 = vmatpush.msra.mxu0 0.0
    %534 = vmatpush.msra.mxu0 0.0
    %535 = vmatpush.msra.mxu0 0.0
    %536 = vmatpush.msra.mxu0 0.0
    %537 = vmatpush.msra.mxu0 0.0
    %538 = vmatpush.msra.mxu0 %v503
    %539 = vmatpush.msra.mxu0 %v502
    %540 = vmatpush.msra.mxu0 %v501
    %541 = vmatpush.msra.mxu0 %v500
    %542 = vmatpush.msra.mxu0 %v499
    %543 = vmatpush.msra.mxu0 %v498
    %544 = vmatpush.msra.mxu0 %v497
    %545 = vmatpush.msra.mxu0 %v496
    %546 = vmatmul.f32.gmra.mxu0 %v508
    %v547 = vpop.f32.mrf.mxu0
    %v548 = vadd.f32 %v528, %v547
    %549 = vdwg.mxu0
    %v550 = vmax.f32 %v548, 0.0
    %v551 = vld [vmem:[#allocation2 + $0x410] sm:$0xff]
    %v552 = vld [vmem:[#allocation2 + $0x420] sm:$0xff]
    %v553 = vld [vmem:[#allocation2 + $0x430] sm:$0xff]
    %v554 = vld [vmem:[#allocation2 + $0x440] sm:$0xff]
    %v555 = vld [vmem:[#allocation2 + $0x450] sm:$0xff]
    %v556 = vld [vmem:[#allocation2 + $0x460] sm:$0xff]
    %v557 = vld [vmem:[#allocation2 + $0x470] sm:$0xff]
    %v558 = vld [vmem:[#allocation2 + $0x480] sm:$0xff]
    %v559 = vld [vmem:[#allocation2 + $0x490] sm:$0xff]
    %v560 = vld [vmem:[#allocation2 + $0x4a0] sm:$0xff]
    %v561 = vld [vmem:[#allocation2 + $0x4b0] sm:$0xff]
    %v562 = vld [vmem:[#allocation2 + $0x4c0] sm:$0xff]
    %v563 = vld [vmem:[#allocation2 + $0x4d0] sm:$0xff]
    %v564 = vld [vmem:[#allocation2 + $0x4e0] sm:$0xff]
    %v565 = vld [vmem:[#allocation2 + $0x4f0] sm:$0xff]
    %v566 = vld [vmem:[#allocation2 + $0x500] sm:$0xff]
    %v567 = vld [vmem:[%s3 + $0x5] sm:$0x1]
    %v569 = vperm.slane %v567, 0
    %571 = vmatpush.msra.mxu0 %v566
    %572 = vmatpush.msra.mxu0 %v565
    %573 = vmatpush.msra.mxu0 %v564
    %574 = vmatpush.msra.mxu0 %v563
    %575 = vmatpush.msra.mxu0 %v562
    %576 = vmatpush.msra.mxu0 %v561
    %577 = vmatpush.msra.mxu0 %v560
    %578 = vmatpush.msra.mxu0 %v559
    %579 = vmatpush.msra.mxu0 %v558
    %580 = vmatpush.msra.mxu0 %v557
    %581 = vmatpush.msra.mxu0 %v556
    %582 = vmatpush.msra.mxu0 %v555
    %583 = vmatpush.msra.mxu0 %v554
    %584 = vmatpush.msra.mxu0 %v553
    %585 = vmatpush.msra.mxu0 %v552
    %586 = vmatpush.msra.mxu0 %v551
    %587 = vmatmul.f32.gmra.mxu0 %v550
    %v588 = vpop.f32.mrf.mxu0
    %v589 = vadd.f32 %v569, %v588
    %590 = vdwg.mxu0
    %v591 = vsel %vm196, %v589, %v358
    %v595 = vrot.slane %v478, 6
    %v596 = vrot.slane %v591, 4
    %vm597 = vcmask 1041408
    %v598 = vsel %vm597, %v458, %v595
    %vm599 = vcmask 1043456
    %v600 = vsel %vm599, %v598, %v596
    %602 = vst [vmem:[#allocation5] sm:$0x3f] %v600
    // Predicated region
    $region22: #{tpu_custom_call.1} parent=1 // pred_check
      _
    $region23: #{tpu_custom_call.1} parent=1 // pred_check_branch
      %604 = sbr.rel (0) target = $region25
    $region24: #{tpu_custom_call.1} parent=1 // pred_region
      %606 = vsyncadd [#allocation4], 0
      %s608 = sshll.u32 [#allocation5], 4
      %s609 = int_to_ptr.vmem [resolvable:$true] %s608
      %s610 = sshll.u32 %s4, 4
      %s611 = int_to_ptr.hbm [resolvable:$true] %s610
      %613 = dma.vmem_to_hbm [thread:$0]  %s609, 96, %s611, [#allocation4]
    $region25: #{tpu_custom_call.1} parent=1 // pred_fallthru
      _
    // Predicated region
    $region26: #{tpu_custom_call.1} parent=1 // pred_check
      _
    $region27: #{tpu_custom_call.1} parent=1 // pred_check_branch
      %615 = sbr.rel (0) target = $region29
    $region28: #{tpu_custom_call.1} parent=1 // pred_region
      %617 = dma.done [#allocation4], 96
    $region29: #{tpu_custom_call.1} parent=1 // pred_fallthru
      _
    %618 = vsyncpa [#allocation3], 1
    %619 = vsyncpa [#allocation4], 1

</llo_original>
